<compile_context>
chip_gen: v7x
topology: tpu7x:2x2x1
jax: 0.10.0
libtpu: 0.0.40
codegen_flags: <defaults>
</compile_context>

<pallas_src>
import jax
import jax.numpy as jnp
from jax.experimental import pallas as pl
from jax.experimental.pallas import tpu as pltpu

LANE = 128          # vreg lane width
MAX_TILE_B = 4096   # lane-dense batch tile (tiny VMEM footprint: (2+1)*4096*4B)


def mlp_kernel(x_ref, w1_ref, b1_ref, w2_ref, b2_ref, w3_ref, b3_ref, o_ref):
    # x_ref: (2, TILE_B) f32 in VMEM; weights/biases are small SMEM tables
    # in PyTorch (out, in) layout.  Everything below is scalar * (1, TILE_B)
    # broadcast-FMAs on the VPU.
    x0 = x_ref[0:1, :]                                    # (1, TILE_B)
    x1 = x_ref[1:2, :]                                    # (1, TILE_B)

    # layer1: Linear(2, 4) + ReLU  -> four (1, TILE_B) rows
    h1 = [
        jnp.maximum(w1_ref[j, 0] * x0 + w1_ref[j, 1] * x1 + b1_ref[j], 0.0)
        for j in range(4)
    ]

    # layer2: Linear(4, 2) + Tanh (tanh -> EUP slot, free filler here)
    h2 = [
        jnp.tanh(w2_ref[j, 0] * h1[0] + w2_ref[j, 1] * h1[1]
                 + w2_ref[j, 2] * h1[2] + w2_ref[j, 3] * h1[3] + b2_ref[j])
        for j in range(2)
    ]

    # layer3: Linear(2, 1) -> lane-dense (1, TILE_B) output slab
    o_ref[...] = w3_ref[0, 0] * h2[0] + w3_ref[0, 1] * h2[1] + b3_ref[0]


def net_neur_forward(x, params):
    """x: (B, 2) f32.  params: PyTorch-layout (out, in) weights + (out,) biases."""
    w1, b1, w2, b2, w3, b3 = params
    B = x.shape[0]

    # Pad batch to a lane-aligned tile; tile as large as possible (<= MAX_TILE_B).
    b_pad = pl.cdiv(B, LANE) * LANE
    tile_b = min(b_pad, MAX_TILE_B)
    b_pad = pl.cdiv(b_pad, tile_b) * tile_b
    grid = (b_pad // tile_b,)

    # Batch on lanes: (B, 2) -> (2, B_pad), zero-padded tail.
    x_t = jnp.pad(x.T.astype(jnp.float32), ((0, 0), (0, b_pad - B)))

    smem = pl.BlockSpec(memory_space=pltpu.MemorySpace.SMEM)

    out = pl.pallas_call(
        mlp_kernel,
        out_shape=jax.ShapeDtypeStruct((1, b_pad), jnp.float32),
        grid=grid,
        in_specs=[
            pl.BlockSpec((2, tile_b), lambda i: (0, i)),   # x slab (VMEM, tiled)
            smem, smem,                                    # w1, b1 (resident)
            smem, smem,                                    # w2, b2
            smem, smem,                                    # w3, b3
        ],
        out_specs=pl.BlockSpec((1, tile_b), lambda i: (0, i)),
        compiler_params=pltpu.CompilerParams(
            dimension_semantics=("parallel",)),            # megacore on v7x
    )(x_t, w1, b1, w2, b2, w3, b3)

    # Drop lane padding, back to PyTorch's (B, 1).
    return out[:, :B].T


def init_params(key):
    """nn.Linear-style U(-1/sqrt(fan_in), 1/sqrt(fan_in)) init.

    Weights stored in PyTorch layout (out_features, in_features); biases (out,)."""
    dims = [(2, 4), (4, 2), (2, 1)]
    params = []
    for fan_in, fan_out in dims:
        key, kw, kb = jax.random.split(key, 3)
        bound = 1.0 / jnp.sqrt(jnp.float32(fan_in))
        w = jax.random.uniform(kw, (fan_out, fan_in), jnp.float32, -bound, bound)
        b = jax.random.uniform(kb, (fan_out,), jnp.float32, -bound, bound)
        params.extend([w, b])
    return tuple(params)


def reference_forward(x, params):
    w1, b1, w2, b2, w3, b3 = params
    h1 = jnp.maximum(x @ w1.T + b1, 0.0)
    h2 = jnp.tanh(h1 @ w2.T + b2)
    return h2 @ w3.T + b3


if __name__ == "__main__":
    key = jax.random.PRNGKey(0)
    k_params, k_x = jax.random.split(key)

    params = init_params(k_params)
    B = 257                                  # non-multiple of 128: exercises padding
    x = jax.random.normal(k_x, (B, 2), jnp.float32)

    out = net_neur_forward(x, params)
    out = jax.block_until_ready(out)

    ref = reference_forward(x, params)
    assert out.shape == (B, 1)
    assert jnp.allclose(out, ref, atol=1e-5, rtol=1e-5)

    print("KERNEL_OK")
</pallas_src>

<mosaic_0001>
module attributes {stable_mosaic.version = 11 : i64} {
  func.func @mlp_kernel(%arg0: i32, %arg1: memref<2x384xf32, #tpu.memory_space<vmem>>, %arg2: memref<4x2xf32, #tpu.memory_space<smem>>, %arg3: memref<4xf32, #tpu.memory_space<smem>>, %arg4: memref<2x4xf32, #tpu.memory_space<smem>>, %arg5: memref<2xf32, #tpu.memory_space<smem>>, %arg6: memref<1x2xf32, #tpu.memory_space<smem>>, %arg7: memref<1xf32, #tpu.memory_space<smem>>, %arg8: memref<1x384xf32, #tpu.memory_space<vmem>>) attributes {dimension_semantics = [#tpu.dimension_semantics<parallel>], iteration_bounds = array<i64: 1>, scalar_prefetch = 0 : i64, scratch_operands = 0 : i64, tpu.core_type = #tpu.core_type<tc>, window_params = [{transform_indices = @transform_0, window_bounds = array<i64: 2, 384>}, {transform_indices = @transform_1, window_bounds = array<i64: 4, 2>}, {transform_indices = @transform_2, window_bounds = array<i64: 4>}, {transform_indices = @transform_3, window_bounds = array<i64: 2, 4>}, {transform_indices = @transform_4, window_bounds = array<i64: 2>}, {transform_indices = @transform_5, window_bounds = array<i64: 1, 2>}, {transform_indices = @transform_6, window_bounds = array<i64: 1>}, {transform_indices = @transform_7, window_bounds = array<i64: 1, 384>}]} {
    %c0 = arith.constant 0 : index
    %c0_0 = arith.constant 0 : index
    %0 = vector.load %arg1[%c0, %c0_0] : memref<2x384xf32, #tpu.memory_space<vmem>>, vector<1x384xf32>
    %c1 = arith.constant 1 : index
    %c0_1 = arith.constant 0 : index
    %1 = vector.load %arg1[%c1, %c0_1] : memref<2x384xf32, #tpu.memory_space<vmem>>, vector<1x384xf32>
    %c0_2 = arith.constant 0 : index
    %c0_3 = arith.constant 0 : index
    %2 = memref.load %arg2[%c0_2, %c0_3] : memref<4x2xf32, #tpu.memory_space<smem>>
    %3 = vector.broadcast %2 : f32 to vector<1x384xf32>
    %4 = arith.mulf %3, %0 : vector<1x384xf32>
    %c0_4 = arith.constant 0 : index
    %c1_5 = arith.constant 1 : index
    %5 = memref.load %arg2[%c0_4, %c1_5] : memref<4x2xf32, #tpu.memory_space<smem>>
    %6 = vector.broadcast %5 : f32 to vector<1x384xf32>
    %7 = arith.mulf %6, %1 : vector<1x384xf32>
    %8 = arith.addf %4, %7 : vector<1x384xf32>
    %c0_6 = arith.constant 0 : index
    %9 = memref.load %arg3[%c0_6] : memref<4xf32, #tpu.memory_space<smem>>
    %10 = vector.broadcast %9 : f32 to vector<1x384xf32>
    %11 = arith.addf %8, %10 : vector<1x384xf32>
    %cst = arith.constant 0.000000e+00 : f32
    %12 = vector.broadcast %cst : f32 to vector<1x384xf32>
    %13 = arith.maximumf %11, %12 : vector<1x384xf32>
    %c1_7 = arith.constant 1 : index
    %c0_8 = arith.constant 0 : index
    %14 = memref.load %arg2[%c1_7, %c0_8] : memref<4x2xf32, #tpu.memory_space<smem>>
    %15 = vector.broadcast %14 : f32 to vector<1x384xf32>
    %16 = arith.mulf %15, %0 : vector<1x384xf32>
    %c1_9 = arith.constant 1 : index
    %c1_10 = arith.constant 1 : index
    %17 = memref.load %arg2[%c1_9, %c1_10] : memref<4x2xf32, #tpu.memory_space<smem>>
    %18 = vector.broadcast %17 : f32 to vector<1x384xf32>
    %19 = arith.mulf %18, %1 : vector<1x384xf32>
    %20 = arith.addf %16, %19 : vector<1x384xf32>
    %c1_11 = arith.constant 1 : index
    %21 = memref.load %arg3[%c1_11] : memref<4xf32, #tpu.memory_space<smem>>
    %22 = vector.broadcast %21 : f32 to vector<1x384xf32>
    %23 = arith.addf %20, %22 : vector<1x384xf32>
    %cst_12 = arith.constant 0.000000e+00 : f32
    %24 = vector.broadcast %cst_12 : f32 to vector<1x384xf32>
    %25 = arith.maximumf %23, %24 : vector<1x384xf32>
    %c2 = arith.constant 2 : index
    %c0_13 = arith.constant 0 : index
    %26 = memref.load %arg2[%c2, %c0_13] : memref<4x2xf32, #tpu.memory_space<smem>>
    %27 = vector.broadcast %26 : f32 to vector<1x384xf32>
    %28 = arith.mulf %27, %0 : vector<1x384xf32>
    %c2_14 = arith.constant 2 : index
    %c1_15 = arith.constant 1 : index
    %29 = memref.load %arg2[%c2_14, %c1_15] : memref<4x2xf32, #tpu.memory_space<smem>>
    %30 = vector.broadcast %29 : f32 to vector<1x384xf32>
    %31 = arith.mulf %30, %1 : vector<1x384xf32>
    %32 = arith.addf %28, %31 : vector<1x384xf32>
    %c2_16 = arith.constant 2 : index
    %33 = memref.load %arg3[%c2_16] : memref<4xf32, #tpu.memory_space<smem>>
    %34 = vector.broadcast %33 : f32 to vector<1x384xf32>
    %35 = arith.addf %32, %34 : vector<1x384xf32>
    %cst_17 = arith.constant 0.000000e+00 : f32
    %36 = vector.broadcast %cst_17 : f32 to vector<1x384xf32>
    %37 = arith.maximumf %35, %36 : vector<1x384xf32>
    %c3 = arith.constant 3 : index
    %c0_18 = arith.constant 0 : index
    %38 = memref.load %arg2[%c3, %c0_18] : memref<4x2xf32, #tpu.memory_space<smem>>
    %39 = vector.broadcast %38 : f32 to vector<1x384xf32>
    %40 = arith.mulf %39, %0 : vector<1x384xf32>
    %c3_19 = arith.constant 3 : index
    %c1_20 = arith.constant 1 : index
    %41 = memref.load %arg2[%c3_19, %c1_20] : memref<4x2xf32, #tpu.memory_space<smem>>
    %42 = vector.broadcast %41 : f32 to vector<1x384xf32>
    %43 = arith.mulf %42, %1 : vector<1x384xf32>
    %44 = arith.addf %40, %43 : vector<1x384xf32>
    %c3_21 = arith.constant 3 : index
    %45 = memref.load %arg3[%c3_21] : memref<4xf32, #tpu.memory_space<smem>>
    %46 = vector.broadcast %45 : f32 to vector<1x384xf32>
    %47 = arith.addf %44, %46 : vector<1x384xf32>
    %cst_22 = arith.constant 0.000000e+00 : f32
    %48 = vector.broadcast %cst_22 : f32 to vector<1x384xf32>
    %49 = arith.maximumf %47, %48 : vector<1x384xf32>
    %c0_23 = arith.constant 0 : index
    %c0_24 = arith.constant 0 : index
    %50 = memref.load %arg4[%c0_23, %c0_24] : memref<2x4xf32, #tpu.memory_space<smem>>
    %51 = vector.broadcast %50 : f32 to vector<1x384xf32>
    %52 = arith.mulf %51, %13 : vector<1x384xf32>
    %c0_25 = arith.constant 0 : index
    %c1_26 = arith.constant 1 : index
    %53 = memref.load %arg4[%c0_25, %c1_26] : memref<2x4xf32, #tpu.memory_space<smem>>
    %54 = vector.broadcast %53 : f32 to vector<1x384xf32>
    %55 = arith.mulf %54, %25 : vector<1x384xf32>
    %56 = arith.addf %52, %55 : vector<1x384xf32>
    %c0_27 = arith.constant 0 : index
    %c2_28 = arith.constant 2 : index
    %57 = memref.load %arg4[%c0_27, %c2_28] : memref<2x4xf32, #tpu.memory_space<smem>>
    %58 = vector.broadcast %57 : f32 to vector<1x384xf32>
    %59 = arith.mulf %58, %37 : vector<1x384xf32>
    %60 = arith.addf %56, %59 : vector<1x384xf32>
    %c0_29 = arith.constant 0 : index
    %c3_30 = arith.constant 3 : index
    %61 = memref.load %arg4[%c0_29, %c3_30] : memref<2x4xf32, #tpu.memory_space<smem>>
    %62 = vector.broadcast %61 : f32 to vector<1x384xf32>
    %63 = arith.mulf %62, %49 : vector<1x384xf32>
    %64 = arith.addf %60, %63 : vector<1x384xf32>
    %c0_31 = arith.constant 0 : index
    %65 = memref.load %arg5[%c0_31] : memref<2xf32, #tpu.memory_space<smem>>
    %66 = vector.broadcast %65 : f32 to vector<1x384xf32>
    %67 = arith.addf %64, %66 : vector<1x384xf32>
    %68 = math.tanh %67 : vector<1x384xf32>
    %c1_32 = arith.constant 1 : index
    %c0_33 = arith.constant 0 : index
    %69 = memref.load %arg4[%c1_32, %c0_33] : memref<2x4xf32, #tpu.memory_space<smem>>
    %70 = vector.broadcast %69 : f32 to vector<1x384xf32>
    %71 = arith.mulf %70, %13 : vector<1x384xf32>
    %c1_34 = arith.constant 1 : index
    %c1_35 = arith.constant 1 : index
    %72 = memref.load %arg4[%c1_34, %c1_35] : memref<2x4xf32, #tpu.memory_space<smem>>
    %73 = vector.broadcast %72 : f32 to vector<1x384xf32>
    %74 = arith.mulf %73, %25 : vector<1x384xf32>
    %75 = arith.addf %71, %74 : vector<1x384xf32>
    %c1_36 = arith.constant 1 : index
    %c2_37 = arith.constant 2 : index
    %76 = memref.load %arg4[%c1_36, %c2_37] : memref<2x4xf32, #tpu.memory_space<smem>>
    %77 = vector.broadcast %76 : f32 to vector<1x384xf32>
    %78 = arith.mulf %77, %37 : vector<1x384xf32>
    %79 = arith.addf %75, %78 : vector<1x384xf32>
    %c1_38 = arith.constant 1 : index
    %c3_39 = arith.constant 3 : index
    %80 = memref.load %arg4[%c1_38, %c3_39] : memref<2x4xf32, #tpu.memory_space<smem>>
    %81 = vector.broadcast %80 : f32 to vector<1x384xf32>
    %82 = arith.mulf %81, %49 : vector<1x384xf32>
    %83 = arith.addf %79, %82 : vector<1x384xf32>
    %c1_40 = arith.constant 1 : index
    %84 = memref.load %arg5[%c1_40] : memref<2xf32, #tpu.memory_space<smem>>
    %85 = vector.broadcast %84 : f32 to vector<1x384xf32>
    %86 = arith.addf %83, %85 : vector<1x384xf32>
    %87 = math.tanh %86 : vector<1x384xf32>
    %c0_41 = arith.constant 0 : index
    %c0_42 = arith.constant 0 : index
    %88 = memref.load %arg6[%c0_41, %c0_42] : memref<1x2xf32, #tpu.memory_space<smem>>
    %89 = vector.broadcast %88 : f32 to vector<1x384xf32>
    %90 = arith.mulf %89, %68 : vector<1x384xf32>
    %c0_43 = arith.constant 0 : index
    %c1_44 = arith.constant 1 : index
    %91 = memref.load %arg6[%c0_43, %c1_44] : memref<1x2xf32, #tpu.memory_space<smem>>
    %92 = vector.broadcast %91 : f32 to vector<1x384xf32>
    %93 = arith.mulf %92, %87 : vector<1x384xf32>
    %94 = arith.addf %90, %93 : vector<1x384xf32>
    %c0_45 = arith.constant 0 : index
    %95 = memref.load %arg7[%c0_45] : memref<1xf32, #tpu.memory_space<smem>>
    %96 = vector.broadcast %95 : f32 to vector<1x384xf32>
    %97 = arith.addf %94, %96 : vector<1x384xf32>
    %c0_46 = arith.constant 0 : index
    %c0_47 = arith.constant 0 : index
    %98 = vector.load %arg8[%c0_46, %c0_47] : memref<1x384xf32, #tpu.memory_space<vmem>>, vector<1x384xf32>
    tpu.vector_store %arg8[%c0_46, %c0_47], %97 {strides = array<i32>} : memref<1x384xf32, #tpu.memory_space<vmem>>, vector<1x384xf32>,
    return
  }
  func.func @transform_0(%arg0: i32) -> (i32, i32) {
    %c0_i32 = arith.constant 0 : i32
    %c0_i32_0 = arith.constant 0 : i32
    return %c0_i32, %arg0 : i32, i32
  }
  func.func @transform_1(%arg0: i32) -> (i32, i32) {
    %c0_i32 = arith.constant 0 : i32
    %c0_i32_0 = arith.constant 0 : i32
    %c0_i32_1 = arith.constant 0 : i32
    return %c0_i32, %c0_i32_0 : i32, i32
  }
  func.func @transform_2(%arg0: i32) -> i32 {
    %c0_i32 = arith.constant 0 : i32
    %c0_i32_0 = arith.constant 0 : i32
    return %c0_i32 : i32
  }
  func.func @transform_3(%arg0: i32) -> (i32, i32) {
    %c0_i32 = arith.constant 0 : i32
    %c0_i32_0 = arith.constant 0 : i32
    %c0_i32_1 = arith.constant 0 : i32
    return %c0_i32, %c0_i32_0 : i32, i32
  }
  func.func @transform_4(%arg0: i32) -> i32 {
    %c0_i32 = arith.constant 0 : i32
    %c0_i32_0 = arith.constant 0 : i32
    return %c0_i32 : i32
  }
  func.func @transform_5(%arg0: i32) -> (i32, i32) {
    %c0_i32 = arith.constant 0 : i32
    %c0_i32_0 = arith.constant 0 : i32
    %c0_i32_1 = arith.constant 0 : i32
    return %c0_i32, %c0_i32_0 : i32, i32
  }
  func.func @transform_6(%arg0: i32) -> i32 {
    %c0_i32 = arith.constant 0 : i32
    %c0_i32_0 = arith.constant 0 : i32
    return %c0_i32 : i32
  }
  func.func @transform_7(%arg0: i32) -> (i32, i32) {
    %c0_i32 = arith.constant 0 : i32
    %c0_i32_0 = arith.constant 0 : i32
    return %c0_i32, %arg0 : i32, i32
  }
}

</mosaic_0001>

<llo_original>
// kernel: tpu_custom_call.1
$region0: #{tpu_custom_call.1}
  #allocation0 [shape = 'u32[]', space=smem, size = 0x4, offset = 0x4, fixed_abs, tag = 'smem constant byte address 0x4 - core index']
  #allocation1 [shape = 'u32[144,128]{1,0:T(1,128)}', space=vmem, size = 0x12000, scoped, tag = 'internal scratch']
  #allocation2 [shape = 'f32[1]{0:T(128)S(6)}', space=smem, size = 0x200, scoped, tag = 'scoped memory for tpu_custom_call.1']
  %s0 = inlined_call_operand.vmem [shape: f32[2,384], index: 0, kind: input, shape index: {}]
  %s1 = inlined_call_operand.vmem [shape: f32[4,2], index: 1, kind: input, shape index: {}]
  %s2 = inlined_call_operand.vmem [shape: f32[4], index: 2, kind: input, shape index: {}]
  %s3 = inlined_call_operand.vmem [shape: f32[2,4], index: 3, kind: input, shape index: {}]
  %s4 = inlined_call_operand.vmem [shape: f32[2], index: 4, kind: input, shape index: {}]
  %s5 = inlined_call_operand.vmem [shape: f32[1,2], index: 5, kind: input, shape index: {}]
  %s6 = inlined_call_operand.<no memory space> [shape: f32[1], index: 6, kind: input, shape index: {}]
  %s7 = inlined_call_operand.hbm [shape: f32[1,384], index: 7, kind: output, shape index: {}]
  %s8 = sld [smem:[#allocation0]]
  $region58: #{tpu_custom_call.1} parent=0
    _
  %s10 = ssub.s32 1, %s8
  %s11 = scalar_select 0, %s10, %s8
  %12 = sst [smem:[#allocation2]] %s6
  $region1: #{tpu_custom_call.1} parent=0
    #allocation3 [shape = 'u8[2048]{0}', space=smem, size = 0x800, scoped, tag = 'input window, operand 1, single buffered']
    #allocation4 [shape = 's32[1]{0}', space=sflag, size = 0x4, scoped, tag = 'scoped memory for tpu_custom_call.1']
    #allocation5 [shape = 's32[1]{0}', space=sflag, size = 0x4, scoped, tag = 'scoped memory for tpu_custom_call.1']
    #allocation6 [shape = 'u8[512]{0}', space=smem, size = 0x200, scoped, tag = 'input window, operand 2, single buffered']
    #allocation7 [shape = 's32[1]{0}', space=sflag, size = 0x4, scoped, tag = 'scoped memory for tpu_custom_call.1']
    #allocation8 [shape = 'u8[1024]{0}', space=smem, size = 0x400, scoped, tag = 'input window, operand 3, single buffered']
    #allocation9 [shape = 'u8[512]{0}', space=smem, size = 0x200, scoped, tag = 'input window, operand 4, single buffered']
    #allocation10 [shape = 's32[1]{0}', space=sflag, size = 0x4, scoped, tag = 'scoped memory for tpu_custom_call.1']
    #allocation11 [shape = 'u8[512]{0}', space=smem, size = 0x200, scoped, tag = 'input window, operand 5, single buffered']
    #allocation12 [shape = 'u8[1536]{0}', space=vmem, size = 0x800, scoped, tag = 'output window, operand 0, single buffered']
    %13 = vsyncpa [#allocation5], 0
    %14 = vsyncpa [#allocation7], 0
    %15 = vsyncpa [#allocation10], 0
    %16 = vsyncpa [#allocation4], 0
    // Predicated region
    $region2: #{tpu_custom_call.1} parent=1 // pred_check
      _
    $region3: #{tpu_custom_call.1} parent=1 // pred_check_branch
      %18 = sbr.rel (0) target = $region5
    $region4: #{tpu_custom_call.1} parent=1 // pred_region
      _
    $region5: #{tpu_custom_call.1} parent=1 // pred_fallthru
      _
    // Predicated region
    $region6: #{tpu_custom_call.1} parent=1 // pred_check
      _
    $region7: #{tpu_custom_call.1} parent=1 // pred_check_branch
      %20 = sbr.rel (0) target = $region9
    $region8: #{tpu_custom_call.1} parent=1 // pred_region
      %s22 = ssub.s32 64, 64
      %23 = vsyncadd [#allocation5], %s22
      %s25 = sshll.u32 %s1, 4
      %s26 = int_to_ptr.vmem [resolvable:$true] %s25
      %28 = dma.vmem_to_smem %s26, 64, [#allocation3], [#allocation5]
    $region9: #{tpu_custom_call.1} parent=1 // pred_fallthru
      _
    // Predicated region
    $region10: #{tpu_custom_call.1} parent=1 // pred_check
      _
    $region11: #{tpu_custom_call.1} parent=1 // pred_check_branch
      %30 = sbr.rel (0) target = $region13
    $region12: #{tpu_custom_call.1} parent=1 // pred_region
      %s32 = ssub.s32 16, 16
      %33 = vsyncadd [#allocation7], %s32
      %s35 = sshll.u32 %s2, 4
      %s36 = int_to_ptr.vmem [resolvable:$true] %s35
      %38 = dma.vmem_to_smem %s36, 16, [#allocation6], [#allocation7]
    $region13: #{tpu_custom_call.1} parent=1 // pred_fallthru
      _
    // Predicated region
    $region14: #{tpu_custom_call.1} parent=1 // pred_check
      _
    $region15: #{tpu_custom_call.1} parent=1 // pred_check_branch
      %40 = sbr.rel (0) target = $region17
    $region16: #{tpu_custom_call.1} parent=1 // pred_region
      %s42 = ssub.s32 32, 32
      %43 = vsyncadd [#allocation7], %s42
      %s45 = sshll.u32 %s3, 4
      %s46 = int_to_ptr.vmem [resolvable:$true] %s45
      %48 = dma.vmem_to_smem %s46, 32, [#allocation8], [#allocation7]
    $region17: #{tpu_custom_call.1} parent=1 // pred_fallthru
      _
    // Predicated region
    $region18: #{tpu_custom_call.1} parent=1 // pred_check
      _
    $region19: #{tpu_custom_call.1} parent=1 // pred_check_branch
      %50 = sbr.rel (0) target = $region21
    $region20: #{tpu_custom_call.1} parent=1 // pred_region
      %s52 = ssub.s32 16, 16
      %53 = vsyncadd [#allocation10], %s52
      %s55 = sshll.u32 %s4, 4
      %s56 = int_to_ptr.vmem [resolvable:$true] %s55
      %58 = dma.vmem_to_smem %s56, 16, [#allocation9], [#allocation10]
    $region21: #{tpu_custom_call.1} parent=1 // pred_fallthru
      _
    // Predicated region
    $region22: #{tpu_custom_call.1} parent=1 // pred_check
      _
    $region23: #{tpu_custom_call.1} parent=1 // pred_check_branch
      %60 = sbr.rel (0) target = $region25
    $region24: #{tpu_custom_call.1} parent=1 // pred_region
      %s62 = ssub.s32 16, 16
      %63 = vsyncadd [#allocation10], %s62
      %s65 = sshll.u32 %s5, 4
      %s66 = int_to_ptr.vmem [resolvable:$true] %s65
      %68 = dma.vmem_to_smem %s66, 16, [#allocation11], [#allocation10]
    $region25: #{tpu_custom_call.1} parent=1 // pred_fallthru
      _
    // Predicated region
    $region26: #{tpu_custom_call.1} parent=1 // pred_check
      _
    $region27: #{tpu_custom_call.1} parent=1 // pred_check_branch
      %70 = sbr.rel (0) target = $region29
    $region28: #{tpu_custom_call.1} parent=1 // pred_region
      _
    $region29: #{tpu_custom_call.1} parent=1 // pred_fallthru
      _
    // Predicated region
    $region30: #{tpu_custom_call.1} parent=1 // pred_check
      _
    $region31: #{tpu_custom_call.1} parent=1 // pred_check_branch
      %72 = sbr.rel (0) target = $region33
    $region32: #{tpu_custom_call.1} parent=1 // pred_region
      %73 = dma.done [#allocation5], 64
    $region33: #{tpu_custom_call.1} parent=1 // pred_fallthru
      _
    // Predicated region
    $region34: #{tpu_custom_call.1} parent=1 // pred_check
      _
    $region35: #{tpu_custom_call.1} parent=1 // pred_check_branch
      %75 = sbr.rel (0) target = $region37
    $region36: #{tpu_custom_call.1} parent=1 // pred_region
      %76 = dma.done [#allocation7], 16
    $region37: #{tpu_custom_call.1} parent=1 // pred_fallthru
      _
    // Predicated region
    $region38: #{tpu_custom_call.1} parent=1 // pred_check
      _
    $region39: #{tpu_custom_call.1} parent=1 // pred_check_branch
      %78 = sbr.rel (0) target = $region41
    $region40: #{tpu_custom_call.1} parent=1 // pred_region
      %79 = dma.done [#allocation7], 32
    $region41: #{tpu_custom_call.1} parent=1 // pred_fallthru
      _
    // Predicated region
    $region42: #{tpu_custom_call.1} parent=1 // pred_check
      _
    $region43: #{tpu_custom_call.1} parent=1 // pred_check_branch
      %81 = sbr.rel (0) target = $region45
    $region44: #{tpu_custom_call.1} parent=1 // pred_region
      %82 = dma.done [#allocation10], 16
    $region45: #{tpu_custom_call.1} parent=1 // pred_fallthru
      _
    // Predicated region
    $region46: #{tpu_custom_call.1} parent=1 // pred_check
      _
    $region47: #{tpu_custom_call.1} parent=1 // pred_check_branch
      %84 = sbr.rel (0) target = $region49
    $region48: #{tpu_custom_call.1} parent=1 // pred_region
      %85 = dma.done [#allocation10], 16
    $region49: #{tpu_custom_call.1} parent=1 // pred_fallthru
      _
    %86 = sfence
    %v87 = vld [vmem:[%s0] ss:$2 sm:$0x7]
    %s88 = scalar_lea.vmem %s0, 1
    %v89 = vld [vmem:[%s88] ss:$2 sm:$0x7]
    %s90 = sld [smem:[#allocation3]]
    %v91 = vstv %s90
    %v92 = vmul.f32 %v91, %v87
    %s93 = sld [smem:[#allocation3 + $0x1]]
    %v94 = vstv %s93
    %v95 = vmul.f32 %v94, %v89
    %v96 = vadd.f32 %v92, %v95
    %s97 = sld [smem:[#allocation6]]
    %v98 = vstv %s97
    %v99 = vadd.f32 %v96, %v98
    %v100 = vmax.f32 %v99, 0.0
    %s101 = sld [smem:[#allocation3 + $0x80]]
    %v102 = vstv %s101
    %v103 = vmul.f32 %v102, %v87
    %s104 = sld [smem:[#allocation3 + $0x81]]
    %v105 = vstv %s104
    %v106 = vmul.f32 %v105, %v89
    %v107 = vadd.f32 %v103, %v106
    %s108 = sld [smem:[#allocation6 + $0x1]]
    %v109 = vstv %s108
    %v110 = vadd.f32 %v107, %v109
    %v111 = vmax.f32 %v110, 0.0
    %s112 = sld [smem:[#allocation3 + $0x100]]
    %v113 = vstv %s112
    %v114 = vmul.f32 %v113, %v87
    %s115 = sld [smem:[#allocation3 + $0x101]]
    %v116 = vstv %s115
    %v117 = vmul.f32 %v116, %v89
    %v118 = vadd.f32 %v114, %v117
    %s119 = sld [smem:[#allocation6 + $0x2]]
    %v120 = vstv %s119
    %v121 = vadd.f32 %v118, %v120
    %v122 = vmax.f32 %v121, 0.0
    %s123 = sld [smem:[#allocation3 + $0x180]]
    %v124 = vstv %s123
    %v125 = vmul.f32 %v124, %v87
    %s126 = sld [smem:[#allocation3 + $0x181]]
    %v127 = vstv %s126
    %v128 = vmul.f32 %v127, %v89
    %v129 = vadd.f32 %v125, %v128
    %s130 = sld [smem:[#allocation6 + $0x3]]
    %v131 = vstv %s130
    %v132 = vadd.f32 %v129, %v131
    %v133 = vmax.f32 %v132, 0.0
    %s134 = sld [smem:[#allocation8]]
    %v135 = vstv %s134
    %v136 = vmul.f32 %v135, %v100
    %s137 = sld [smem:[#allocation8 + $0x1]]
    %v138 = vstv %s137
    %v139 = vmul.f32 %v138, %v111
    %v140 = vadd.f32 %v136, %v139
    %s141 = sld [smem:[#allocation8 + $0x2]]
    %v142 = vstv %s141
    %v143 = vmul.f32 %v142, %v122
    %v144 = vadd.f32 %v140, %v143
    %s145 = sld [smem:[#allocation8 + $0x3]]
    %v146 = vstv %s145
    %v147 = vmul.f32 %v146, %v133
    %v148 = vadd.f32 %v144, %v147
    %s149 = sld [smem:[#allocation9]]
    %v150 = vstv %s149
    %v151 = vadd.f32 %v148, %v150
    %v152 = vtanh.pop %v151
    %s153 = sld [smem:[#allocation8 + $0x80]]
    %v154 = vstv %s153
    %v155 = vmul.f32 %v154, %v100
    %s156 = sld [smem:[#allocation8 + $0x81]]
    %v157 = vstv %s156
    %v158 = vmul.f32 %v157, %v111
    %v159 = vadd.f32 %v155, %v158
    %s160 = sld [smem:[#allocation8 + $0x82]]
    %v161 = vstv %s160
    %v162 = vmul.f32 %v161, %v122
    %v163 = vadd.f32 %v159, %v162
    %s164 = sld [smem:[#allocation8 + $0x83]]
    %v165 = vstv %s164
    %v166 = vmul.f32 %v165, %v133
    %v167 = vadd.f32 %v163, %v166
    %s168 = sld [smem:[#allocation9 + $0x1]]
    %v169 = vstv %s168
    %v170 = vadd.f32 %v167, %v169
    %v171 = vtanh.pop %v170
    %s172 = sld [smem:[#allocation11]]
    %v173 = vstv %s172
    %v174 = vmul.f32 %v173, %v152
    %s175 = sld [smem:[#allocation11 + $0x1]]
    %v176 = vstv %s175
    %v177 = vmul.f32 %v176, %v171
    %v178 = vadd.f32 %v174, %v177
    %s179 = sld [smem:[#allocation2]]
    %v180 = vstv %s179
    %v181 = vadd.f32 %v178, %v180
    %v182 = vlaneseq
    %vm183 = vcmp.ge.s32.totalorder %v182, 0
    %vm184 = vcmp.lt.s32.totalorder %v182, 384
    %vm185 = vmand %vm183, %vm184
    %186 = vst.msk [vmem:[#allocation12] sm:$0x7] %vm185, %v181
    // Predicated region
    $region50: #{tpu_custom_call.1} parent=1 // pred_check
      _
    $region51: #{tpu_custom_call.1} parent=1 // pred_check_branch
      %188 = sbr.rel (0) target = $region53
    $region52: #{tpu_custom_call.1} parent=1 // pred_region
      %s190 = ssub.s32 48, 48
      %191 = vsyncadd [#allocation4], %s190
      %s193 = sshll.u32 [#allocation12], 4
      %s194 = int_to_ptr.vmem [resolvable:$true] %s193
      %196 = dma.vmem_to_hbm [thread:$0]  %s194, 48, %s7, [#allocation4]
    $region53: #{tpu_custom_call.1} parent=1 // pred_fallthru
      _
    // Predicated region
    $region54: #{tpu_custom_call.1} parent=1 // pred_check
      _
    $region55: #{tpu_custom_call.1} parent=1 // pred_check_branch
      %198 = sbr.rel (0) target = $region57
    $region56: #{tpu_custom_call.1} parent=1 // pred_region
      %199 = dma.done [#allocation4], 48
    $region57: #{tpu_custom_call.1} parent=1 // pred_fallthru
      _
    %200 = vsyncpa [#allocation4], 1
    %201 = vsyncpa [#allocation5], 1
    %202 = vsyncpa [#allocation7], 1
    %203 = vsyncpa [#allocation10], 1

</llo_original>
